<compile_context>
chip_gen: v7x
topology: tpu7x:2x2x1
jax: 0.10.0
libtpu: 0.0.40
codegen_flags: <defaults>
</compile_context>

<pallas_src>
import jax
import jax.numpy as jnp
from jax.experimental import pallas as pl
from jax.experimental.pallas import tpu as pltpu

LANE = 128


def _round_up(x, m):
    return ((x + m - 1) // m) * m


def mlp_kernel(off_ref, x_ref, w1_ref, b1_ref, w2_ref, b2_ref, w3_ref, b3_ref,
               o_ref):
    # Linear -> ReLU -> Linear -> ReLU -> Linear, bf16 MXU operands, f32 acc.
    h1 = jnp.dot(x_ref[...], w1_ref[...], preferred_element_type=jnp.float32)
    h1 = jnp.maximum(h1 + b1_ref[...], 0.0)
    h2 = jnp.dot(h1.astype(jnp.bfloat16), w2_ref[...],
                 preferred_element_type=jnp.float32)
    h2 = jnp.maximum(h2 + b2_ref[...], 0.0)
    out = jnp.dot(h2.astype(jnp.bfloat16), w3_ref[...],
                  preferred_element_type=jnp.float32)
    out = out + b3_ref[...]
    # Task-offset masking (also fills the lane-padding columns, which the
    # wrapper slices away).  No-op on visible columns when offsets are
    # (0, n_outputs), i.e. the non-cifar case.
    col = jax.lax.broadcasted_iota(jnp.int32, out.shape, 1)
    mask = (col < off_ref[0]) | (col >= off_ref[1])
    o_ref[...] = jnp.where(mask, jnp.float32(-1e11), out)


def net_forward(x, kparams, offset1, offset2, n_outputs, *, tile_b=128):
    """Pallas implementation of Net.forward(x, t) for the MLP branch.

    kparams are the kernel-layout params from prepare_params (bf16 weights
    pre-transposed to (in, out) and lane-padded; f32 biases shaped (1, pad)).
    """
    w1t, b1, w2t, b2, w3t, b3 = kparams
    B, n_in = x.shape
    n_in_pad = w1t.shape[0]
    n_hid_pad = w1t.shape[1]
    n_out_pad = w3t.shape[1]

    # Batch tiling: tile_b multiple of 16 (bf16 sublane packing) so block
    # shapes satisfy the (8,128) constraint for both f32 and bf16 views.
    tile_b = min(tile_b, _round_up(B, 16))
    b_pad = _round_up(B, tile_b)

    x_b = x.astype(jnp.bfloat16)
    if b_pad != B or n_in_pad != n_in:
        x_b = jnp.pad(x_b, ((0, b_pad - B), (0, n_in_pad - n_in)))

    offsets = jnp.asarray(
        jnp.stack([jnp.int32(offset1), jnp.int32(offset2)]), dtype=jnp.int32)

    grid = (b_pad // tile_b,)

    def resident(shape):
        # Same block index every grid step -> stays in VMEM, no re-DMA.
        return pl.BlockSpec(shape, lambda i, off: (0, 0))

    flops = 2 * b_pad * (n_in_pad * n_hid_pad + n_hid_pad * n_hid_pad
                         + n_hid_pad * n_out_pad)
    bytes_accessed = (
        x_b.size * 2                                               # bf16 activations in
        + sum(int(p.size) * p.dtype.itemsize for p in kparams)    # weights / biases
        + b_pad * n_out_pad * 4)                                   # f32 output

    out = pl.pallas_call(
        mlp_kernel,
        out_shape=jax.ShapeDtypeStruct((b_pad, n_out_pad), jnp.float32),
        grid_spec=pltpu.PrefetchScalarGridSpec(
            num_scalar_prefetch=1,
            grid=grid,
            in_specs=[
                pl.BlockSpec((tile_b, n_in_pad), lambda i, off: (i, 0)),
                resident(w1t.shape), resident(b1.shape),
                resident(w2t.shape), resident(b2.shape),
                resident(w3t.shape), resident(b3.shape),
            ],
            out_specs=pl.BlockSpec((tile_b, n_out_pad), lambda i, off: (i, 0)),
        ),
        compiler_params=pltpu.CompilerParams(
            dimension_semantics=("parallel",),
            vmem_limit_bytes=32 * 1024 * 1024,   # sized for v7x scoped budget
        ),
        cost_estimate=pl.CostEstimate(
            flops=flops, transcendentals=0, bytes_accessed=bytes_accessed),
    )(offsets, x_b, w1t, b1, w2t, b2, w3t, b3)

    # Strip batch and lane padding back to the PyTorch-visible shape.
    return out[:B, :n_outputs]


def init_params(key, n_inputs, n_hiddens, n_outputs):
    """Deterministic parameter init, PyTorch Linear shapes: W is (out, in)."""
    ks = jax.random.split(key, 6)
    sizes = [(n_hiddens, n_inputs), (n_hiddens, n_hiddens),
             (n_outputs, n_hiddens)]
    params = []
    for li, (out_f, in_f) in enumerate(sizes):
        bound = 1.0 / jnp.sqrt(jnp.float32(in_f))
        w = jax.random.uniform(ks[2 * li], (out_f, in_f), jnp.float32,
                               -bound, bound)
        b = jax.random.uniform(ks[2 * li + 1], (out_f,), jnp.float32,
                               -bound, bound)
        params.append((w, b))
    return params


def prepare_params(torch_params, n_inputs, n_hiddens, n_outputs):
    """Layout plumbing: transpose W to (in, out), zero-pad input / hidden /
    output dims to 128 lanes (exact through Linear+ReLU since padding is
    zeros), cast weights to bf16, keep biases f32 shaped (1, padded)."""
    n_in_pad = _round_up(n_inputs, LANE)
    n_hid_pad = _round_up(n_hiddens, LANE)
    n_out_pad = _round_up(n_outputs, LANE)

    (w1, b1), (w2, b2), (w3, b3) = torch_params

    def pad_to(a, rows, cols):
        return jnp.pad(a, ((0, rows - a.shape[0]), (0, cols - a.shape[1])))

    w1t = pad_to(w1.T, n_in_pad, n_hid_pad).astype(jnp.bfloat16)
    w2t = pad_to(w2.T, n_hid_pad, n_hid_pad).astype(jnp.bfloat16)
    w3t = pad_to(w3.T, n_hid_pad, n_out_pad).astype(jnp.bfloat16)
    b1p = jnp.pad(b1, (0, n_hid_pad - n_hiddens)).reshape(1, n_hid_pad)
    b2p = jnp.pad(b2, (0, n_hid_pad - n_hiddens)).reshape(1, n_hid_pad)
    b3p = jnp.pad(b3, (0, n_out_pad - n_outputs)).reshape(1, n_out_pad)
    return (w1t, b1p, w2t, b2p, w3t, b3p)


def ref_forward(x, kparams, offset1, offset2, n_outputs):
    """Pure-JAX reference mirroring the kernel's bf16-operand / f32-acc math."""
    w1t, b1, w2t, b2, w3t, b3 = kparams
    n_in_pad = w1t.shape[0]
    xb = jnp.pad(x.astype(jnp.bfloat16), ((0, 0), (0, n_in_pad - x.shape[1])))
    h1 = jnp.maximum(
        jnp.dot(xb, w1t, preferred_element_type=jnp.float32) + b1, 0.0)
    h2 = jnp.maximum(
        jnp.dot(h1.astype(jnp.bfloat16), w2t,
                preferred_element_type=jnp.float32) + b2, 0.0)
    out = jnp.dot(h2.astype(jnp.bfloat16), w3t,
                  preferred_element_type=jnp.float32) + b3
    col = jnp.arange(out.shape[1])[None, :]
    mask = (col < offset1) | (col >= offset2)
    out = jnp.where(mask, jnp.float32(-1e11), out)
    return out[:, :n_outputs]


if __name__ == "__main__":
    # MLP([n_inputs] + [n_hiddens]*n_layers + [n_outputs]) with n_layers=2.
    # batch=200 is deliberately not a tile multiple to exercise batch padding;
    # TILE_B=128 -> grid=(2,).
    batch, n_inputs, n_hiddens, n_outputs = 200, 64, 32, 16

    key = jax.random.PRNGKey(0)
    kx, kp = jax.random.split(key)
    x = jax.random.normal(kx, (batch, n_inputs), jnp.float32)
    torch_params = init_params(kp, n_inputs, n_hiddens, n_outputs)
    kparams = prepare_params(torch_params, n_inputs, n_hiddens, n_outputs)

    fwd = jax.jit(net_forward, static_argnames=("n_outputs", "tile_b"))

    # Case 1: non-cifar path (masking is a no-op on visible columns).
    off1, off2 = 0, n_outputs
    out = jax.block_until_ready(fwd(x, kparams, off1, off2, n_outputs))
    ref = ref_forward(x, kparams, off1, off2, n_outputs)
    assert out.shape == (batch, n_outputs)
    assert jnp.allclose(out, ref, atol=1e-2, rtol=1e-2), float(
        jnp.max(jnp.abs(out - ref)))

    # Case 2: cifar-style task offsets (columns outside [4, 12) filled -1e11).
    off1, off2 = 4, 12
    out2 = jax.block_until_ready(fwd(x, kparams, off1, off2, n_outputs))
    ref2 = ref_forward(x, kparams, off1, off2, n_outputs)
    assert jnp.allclose(out2, ref2, atol=1e-2, rtol=1e-2)
    assert bool(jnp.all(out2[:, :off1] == -1e11))
    assert bool(jnp.all(out2[:, off2:] == -1e11))

    # TODO(synk): the is_cifar branch of Net uses ResNet18; only the MLP branch
    # is implemented here (the offset-masking logic itself is supported
    # in-kernel).  The GEM observe()/QP machinery is training-loop logic, not
    # a forward pass, and is out of scope for this kernel.
    print("KERNEL_OK")
</pallas_src>

<mosaic_0001>
module attributes {stable_mosaic.version = 11 : i64} {
  func.func @mlp_kernel(%arg0: i32, %arg1: memref<2xi32, #tpu.memory_space<smem>>, %arg2: memref<128x128xbf16, #tpu.memory_space<vmem>>, %arg3: memref<128x128xbf16, #tpu.memory_space<vmem>>, %arg4: memref<1x128xf32, #tpu.memory_space<vmem>>, %arg5: memref<128x128xbf16, #tpu.memory_space<vmem>>, %arg6: memref<1x128xf32, #tpu.memory_space<vmem>>, %arg7: memref<128x128xbf16, #tpu.memory_space<vmem>>, %arg8: memref<1x128xf32, #tpu.memory_space<vmem>>, %arg9: memref<128x128xf32, #tpu.memory_space<vmem>>) attributes {dimension_semantics = [#tpu.dimension_semantics<parallel>], iteration_bounds = array<i64: 2>, scalar_prefetch = 1 : i64, scratch_operands = 0 : i64, tpu.core_type = #tpu.core_type<tc>, window_params = [{transform_indices = @transform_0, window_bounds = array<i64: 128, 128>}, {pipeline_mode = #tpu.pipeline_mode<synchronous>, transform_indices = @transform_1, window_bounds = array<i64: 128, 128>}, {pipeline_mode = #tpu.pipeline_mode<synchronous>, transform_indices = @transform_2, window_bounds = array<i64: 1, 128>}, {pipeline_mode = #tpu.pipeline_mode<synchronous>, transform_indices = @transform_3, window_bounds = array<i64: 128, 128>}, {pipeline_mode = #tpu.pipeline_mode<synchronous>, transform_indices = @transform_4, window_bounds = array<i64: 1, 128>}, {pipeline_mode = #tpu.pipeline_mode<synchronous>, transform_indices = @transform_5, window_bounds = array<i64: 128, 128>}, {pipeline_mode = #tpu.pipeline_mode<synchronous>, transform_indices = @transform_6, window_bounds = array<i64: 1, 128>}, {transform_indices = @transform_7, window_bounds = array<i64: 128, 128>}]} {
    %c0 = arith.constant 0 : index
    %c0_0 = arith.constant 0 : index
    %0 = vector.load %arg2[%c0, %c0_0] : memref<128x128xbf16, #tpu.memory_space<vmem>>, vector<128x128xbf16>
    %c0_1 = arith.constant 0 : index
    %c0_2 = arith.constant 0 : index
    %1 = vector.load %arg3[%c0_1, %c0_2] : memref<128x128xbf16, #tpu.memory_space<vmem>>, vector<128x128xbf16>
    %cst = arith.constant dense<0.000000e+00> : vector<128x128xf32>
    %2 = tpu.matmul %0, %1, %cst {dimension_numbers = #tpu.dot_dimension_numbers<[1], [0], [0], [1], [0, 0, 1, 1], [], []>} : vector<128x128xbf16>, vector<128x128xbf16>, vector<128x128xf32> -> vector<128x128xf32>
    %c0_3 = arith.constant 0 : index
    %c0_4 = arith.constant 0 : index
    %3 = vector.load %arg4[%c0_3, %c0_4] : memref<1x128xf32, #tpu.memory_space<vmem>>, vector<1x128xf32>
    %4 = vector.broadcast %3 : vector<1x128xf32> to vector<128x128xf32>
    %5 = arith.addf %2, %4 : vector<128x128xf32>
    %cst_5 = arith.constant 0.000000e+00 : f32
    %6 = vector.broadcast %cst_5 : f32 to vector<128x128xf32>
    %7 = arith.maximumf %5, %6 : vector<128x128xf32>
    %8 = arith.truncf %7 : vector<128x128xf32> to vector<128x128xbf16>
    %c0_6 = arith.constant 0 : index
    %c0_7 = arith.constant 0 : index
    %9 = vector.load %arg5[%c0_6, %c0_7] : memref<128x128xbf16, #tpu.memory_space<vmem>>, vector<128x128xbf16>
    %cst_8 = arith.constant dense<0.000000e+00> : vector<128x128xf32>
    %10 = tpu.matmul %8, %9, %cst_8 {dimension_numbers = #tpu.dot_dimension_numbers<[1], [0], [0], [1], [0, 0, 1, 1], [], []>} : vector<128x128xbf16>, vector<128x128xbf16>, vector<128x128xf32> -> vector<128x128xf32>
    %c0_9 = arith.constant 0 : index
    %c0_10 = arith.constant 0 : index
    %11 = vector.load %arg6[%c0_9, %c0_10] : memref<1x128xf32, #tpu.memory_space<vmem>>, vector<1x128xf32>
    %12 = vector.broadcast %11 : vector<1x128xf32> to vector<128x128xf32>
    %13 = arith.addf %10, %12 : vector<128x128xf32>
    %cst_11 = arith.constant 0.000000e+00 : f32
    %14 = vector.broadcast %cst_11 : f32 to vector<128x128xf32>
    %15 = arith.maximumf %13, %14 : vector<128x128xf32>
    %16 = arith.truncf %15 : vector<128x128xf32> to vector<128x128xbf16>
    %c0_12 = arith.constant 0 : index
    %c0_13 = arith.constant 0 : index
    %17 = vector.load %arg7[%c0_12, %c0_13] : memref<128x128xbf16, #tpu.memory_space<vmem>>, vector<128x128xbf16>
    %cst_14 = arith.constant dense<0.000000e+00> : vector<128x128xf32>
    %18 = tpu.matmul %16, %17, %cst_14 {dimension_numbers = #tpu.dot_dimension_numbers<[1], [0], [0], [1], [0, 0, 1, 1], [], []>} : vector<128x128xbf16>, vector<128x128xbf16>, vector<128x128xf32> -> vector<128x128xf32>
    %c0_15 = arith.constant 0 : index
    %c0_16 = arith.constant 0 : index
    %19 = vector.load %arg8[%c0_15, %c0_16] : memref<1x128xf32, #tpu.memory_space<vmem>>, vector<1x128xf32>
    %20 = vector.broadcast %19 : vector<1x128xf32> to vector<128x128xf32>
    %21 = arith.addf %18, %20 : vector<128x128xf32>
    %22 = tpu.iota {dimensions = array<i32: 1>} : vector<128x128xi32>
    %c0_17 = arith.constant 0 : index
    %23 = memref.load %arg1[%c0_17] : memref<2xi32, #tpu.memory_space<smem>>
    %24 = vector.broadcast %23 : i32 to vector<128x128xi32>
    %25 = arith.cmpi slt, %22, %24 : vector<128x128xi32>
    %c1 = arith.constant 1 : index
    %26 = memref.load %arg1[%c1] : memref<2xi32, #tpu.memory_space<smem>>
    %27 = vector.broadcast %26 : i32 to vector<128x128xi32>
    %28 = arith.cmpi sge, %22, %27 : vector<128x128xi32>
    %29 = arith.ori %25, %28 : vector<128x128xi1>
    %cst_18 = arith.constant -9.99999979E+10 : f32
    %30 = vector.broadcast %cst_18 : f32 to vector<128x128xf32>
    %31 = arith.select %29, %30, %21 : vector<128x128xi1>, vector<128x128xf32>
    %c0_19 = arith.constant 0 : index
    %c0_20 = arith.constant 0 : index
    %32 = vector.load %arg9[%c0_19, %c0_20] : memref<128x128xf32, #tpu.memory_space<vmem>>, vector<128x128xf32>
    tpu.vector_store %arg9[%c0_19, %c0_20], %31 {strides = array<i32>} : memref<128x128xf32, #tpu.memory_space<vmem>>, vector<128x128xf32>,
    return
  }
  func.func @transform_0(%arg0: i32, %arg1: memref<2xi32, #tpu.memory_space<smem>>) -> (i32, i32) {
    %c0_i32 = arith.constant 0 : i32
    %c0_i32_0 = arith.constant 0 : i32
    return %arg0, %c0_i32 : i32, i32
  }
  func.func @transform_1(%arg0: i32, %arg1: memref<2xi32, #tpu.memory_space<smem>>) -> (i32, i32) {
    %c0_i32 = arith.constant 0 : i32
    %c0_i32_0 = arith.constant 0 : i32
    %c0_i32_1 = arith.constant 0 : i32
    return %c0_i32, %c0_i32_0 : i32, i32
  }
  func.func @transform_2(%arg0: i32, %arg1: memref<2xi32, #tpu.memory_space<smem>>) -> (i32, i32) {
    %c0_i32 = arith.constant 0 : i32
    %c0_i32_0 = arith.constant 0 : i32
    %c0_i32_1 = arith.constant 0 : i32
    return %c0_i32, %c0_i32_0 : i32, i32
  }
  func.func @transform_3(%arg0: i32, %arg1: memref<2xi32, #tpu.memory_space<smem>>) -> (i32, i32) {
    %c0_i32 = arith.constant 0 : i32
    %c0_i32_0 = arith.constant 0 : i32
    %c0_i32_1 = arith.constant 0 : i32
    return %c0_i32, %c0_i32_0 : i32, i32
  }
  func.func @transform_4(%arg0: i32, %arg1: memref<2xi32, #tpu.memory_space<smem>>) -> (i32, i32) {
    %c0_i32 = arith.constant 0 : i32
    %c0_i32_0 = arith.constant 0 : i32
    %c0_i32_1 = arith.constant 0 : i32
    return %c0_i32, %c0_i32_0 : i32, i32
  }
  func.func @transform_5(%arg0: i32, %arg1: memref<2xi32, #tpu.memory_space<smem>>) -> (i32, i32) {
    %c0_i32 = arith.constant 0 : i32
    %c0_i32_0 = arith.constant 0 : i32
    %c0_i32_1 = arith.constant 0 : i32
    return %c0_i32, %c0_i32_0 : i32, i32
  }
  func.func @transform_6(%arg0: i32, %arg1: memref<2xi32, #tpu.memory_space<smem>>) -> (i32, i32) {
    %c0_i32 = arith.constant 0 : i32
    %c0_i32_0 = arith.constant 0 : i32
    %c0_i32_1 = arith.constant 0 : i32
    return %c0_i32, %c0_i32_0 : i32, i32
  }
  func.func @transform_7(%arg0: i32, %arg1: memref<2xi32, #tpu.memory_space<smem>>) -> (i32, i32) {
    %c0_i32 = arith.constant 0 : i32
    %c0_i32_0 = arith.constant 0 : i32
    return %arg0, %c0_i32 : i32, i32
  }
}

</mosaic_0001>

<llo_original>
// kernel: net_forward.1
$region0: #{net_forward.1}
  #allocation0 [shape = 'u32[]', space=smem, size = 0x4, offset = 0x4, fixed_abs, tag = 'smem constant byte address 0x4 - core index']
  #allocation1 [shape = 'u32[144,128]{1,0:T(1,128)}', space=vmem, size = 0x12000, scoped, tag = 'internal scratch']
  #allocation2 [shape = 's32[1]{0}', space=sflag, size = 0x4, scoped, tag = 'scoped memory for net_forward.1']
  #allocation3 [shape = 'u8[512]{0}', space=smem, size = 0x200, scoped, tag = 'prefetched SMEM operand 0']
  %s0 = inlined_call_operand.vmem [shape: s32[2], index: 0, kind: input, shape index: {}]
  %s1 = inlined_call_operand.vmem [shape: bf16[256,128], index: 1, kind: input, shape index: {}]
  %s2 = inlined_call_operand.vmem [shape: bf16[128,128], index: 2, kind: input, shape index: {}]
  %s3 = inlined_call_operand.vmem [shape: f32[1,128], index: 3, kind: input, shape index: {}]
  %s4 = inlined_call_operand.vmem [shape: bf16[128,128], index: 4, kind: input, shape index: {}]
  %s5 = inlined_call_operand.vmem [shape: f32[1,128], index: 5, kind: input, shape index: {}]
  %s6 = inlined_call_operand.vmem [shape: bf16[128,128], index: 6, kind: input, shape index: {}]
  %s7 = inlined_call_operand.vmem [shape: f32[1,128], index: 7, kind: input, shape index: {}]
  %s8 = inlined_call_operand.vmem [shape: f32[256,128], index: 8, kind: output, shape index: {}]
  %s9 = sld [smem:[#allocation0]]
  $region61: #{net_forward.1} parent=0
    _
  %s11 = ssub.s32 1, %s9
  %s12 = scalar_select 0, %s11, %s9
  %s13 = sshll.u32 %s0, 4
  %s14 = int_to_ptr.vmem [resolvable:$true] %s13
  %16 = dma.vmem_to_smem %s14, 16, [#allocation3], [#allocation2]
  %17 = dma.done [#allocation2], 16
  %18 = sfence
  loop: start=0, step=1, limit=4
  $region2: #{net_forward.1} parent=0 // loop_pre_header
    _
  $region3: #{net_forward.1} parent=0 // loop_header
    %s20 = sphi 0, %s24
    %p21 = scmp.ge.s32.totalorder %s20, 4
    %s30 = sphi 0, %s32
    %s33 = sphi 0, %s30
    %s34 = sphi 0, %s33
    %s50 = sphi 0, %s34
    %s54 = sphi 0, %s54
    %s56 = sphi 0, %s54
    %s57 = sphi 0, %s56
    %s71 = sphi 0, %s57
    %s75 = sphi 0, %s75
    %s77 = sphi 0, %s75
    %s78 = sphi 0, %s77
    %s92 = sphi 0, %s78
    %s96 = sphi 0, %s96
    %s98 = sphi 0, %s96
    %s99 = sphi 0, %s98
    %s113 = sphi 0, %s99
    %s117 = sphi 0, %s117
    %s119 = sphi 0, %s117
    %s120 = sphi 0, %s119
    %s134 = sphi 0, %s120
    %s138 = sphi 0, %s138
    %s140 = sphi 0, %s138
    %s141 = sphi 0, %s140
    %s155 = sphi 0, %s141
    %s159 = sphi 0, %s159
    %s161 = sphi 0, %s159
    %s162 = sphi 0, %s161
    %s176 = sphi 0, %s162
    %s182 = sphi 0, %s184
    %s185 = sphi 0, %s182
    %s186 = sphi 0, %s185
    %s202 = sphi 0, %s186
  $region4: #{net_forward.1} parent=0 // loop_header_branch
    %23 = sbr.rel (%p21) target = $region8
  $region5: #{net_forward.1} parent=0 // loop_body
    %s25 = ssub.s32 %s20, 1
    %s26 = ssub.s32 %s20, 2
    %s27 = sadd.s32 %s20, 1
    %s28 = ssub.s32 %s20, %s27
    %p29 = scmp.eq.s32.totalorder %s28, 0
    %s31 = sadd.s32 %s30, 1
    %s32 = scalar_select %p29, %s30, %s31
    %p35 = pneg %p29
    %p36 = scmp.eq.s32.totalorder %s20, 1
    %p37 = por %p35, %p36
    %p38 = scmp.ne.s32.totalorder %s30, %s33
    %p39 = scmp.eq.s32.totalorder %s20, 0
    %p40 = por %p38, %p39
    %p41 = scmp.ne.s32.totalorder %s30, %s33
    %p42 = scmp.eq.s32.totalorder %s25, 1
    %p43 = por %p41, %p42
    %p44 = scmp.ne.s32.totalorder %s33, %s34
    %p45 = scmp.eq.s32.totalorder %s25, 0
    %p46 = por %p44, %p45
    %p47 = scmp.ne.s32.totalorder %s33, %s34
    %p48 = scmp.eq.s32.totalorder %s26, 1
    %p49 = por %p47, %p48
    %p51 = scmp.ne.s32.totalorder %s34, %s50
    %p52 = scmp.eq.s32.totalorder %s26, 0
    %p53 = por %p51, %p52
    %s55 = sadd.s32 %s54, 1
    %p58 = scmp.eq.s32.totalorder %s20, 1
    %p59 = scmp.ne.s32.totalorder %s54, %s56
    %p60 = scmp.eq.s32.totalorder %s20, 0
    %p61 = por %p59, %p60
    %p62 = scmp.ne.s32.totalorder %s54, %s56
    %p63 = scmp.eq.s32.totalorder %s25, 1
    %p64 = por %p62, %p63
    %p65 = scmp.ne.s32.totalorder %s56, %s57
    %p66 = scmp.eq.s32.totalorder %s25, 0
    %p67 = por %p65, %p66
    %p68 = scmp.ne.s32.totalorder %s56, %s57
    %p69 = scmp.eq.s32.totalorder %s26, 1
    %p70 = por %p68, %p69
    %p72 = scmp.ne.s32.totalorder %s57, %s71
    %p73 = scmp.eq.s32.totalorder %s26, 0
    %p74 = por %p72, %p73
    %s76 = sadd.s32 %s75, 1
    %p79 = scmp.eq.s32.totalorder %s20, 1
    %p80 = scmp.ne.s32.totalorder %s75, %s77
    %p81 = scmp.eq.s32.totalorder %s20, 0
    %p82 = por %p80, %p81
    %p83 = scmp.ne.s32.totalorder %s75, %s77
    %p84 = scmp.eq.s32.totalorder %s25, 1
    %p85 = por %p83, %p84
    %p86 = scmp.ne.s32.totalorder %s77, %s78
    %p87 = scmp.eq.s32.totalorder %s25, 0
    %p88 = por %p86, %p87
    %p89 = scmp.ne.s32.totalorder %s77, %s78
    %p90 = scmp.eq.s32.totalorder %s26, 1
    %p91 = por %p89, %p90
    %p93 = scmp.ne.s32.totalorder %s78, %s92
    %p94 = scmp.eq.s32.totalorder %s26, 0
    %p95 = por %p93, %p94
    %s97 = sadd.s32 %s96, 1
    %p100 = scmp.eq.s32.totalorder %s20, 1
    %p101 = scmp.ne.s32.totalorder %s96, %s98
    %p102 = scmp.eq.s32.totalorder %s20, 0
    %p103 = por %p101, %p102
    %p104 = scmp.ne.s32.totalorder %s96, %s98
    %p105 = scmp.eq.s32.totalorder %s25, 1
    %p106 = por %p104, %p105
    %p107 = scmp.ne.s32.totalorder %s98, %s99
    %p108 = scmp.eq.s32.totalorder %s25, 0
    %p109 = por %p107, %p108
    %p110 = scmp.ne.s32.totalorder %s98, %s99
    %p111 = scmp.eq.s32.totalorder %s26, 1
    %p112 = por %p110, %p111
    %p114 = scmp.ne.s32.totalorder %s99, %s113
    %p115 = scmp.eq.s32.totalorder %s26, 0
    %p116 = por %p114, %p115
    %s118 = sadd.s32 %s117, 1
    %p121 = scmp.eq.s32.totalorder %s20, 1
    %p122 = scmp.ne.s32.totalorder %s117, %s119
    %p123 = scmp.eq.s32.totalorder %s20, 0
    %p124 = por %p122, %p123
    %p125 = scmp.ne.s32.totalorder %s117, %s119
    %p126 = scmp.eq.s32.totalorder %s25, 1
    %p127 = por %p125, %p126
    %p128 = scmp.ne.s32.totalorder %s119, %s120
    %p129 = scmp.eq.s32.totalorder %s25, 0
    %p130 = por %p128, %p129
    %p131 = scmp.ne.s32.totalorder %s119, %s120
    %p132 = scmp.eq.s32.totalorder %s26, 1
    %p133 = por %p131, %p132
    %p135 = scmp.ne.s32.totalorder %s120, %s134
    %p136 = scmp.eq.s32.totalorder %s26, 0
    %p137 = por %p135, %p136
    %s139 = sadd.s32 %s138, 1
    %p142 = scmp.eq.s32.totalorder %s20, 1
    %p143 = scmp.ne.s32.totalorder %s138, %s140
    %p144 = scmp.eq.s32.totalorder %s20, 0
    %p145 = por %p143, %p144
    %p146 = scmp.ne.s32.totalorder %s138, %s140
    %p147 = scmp.eq.s32.totalorder %s25, 1
    %p148 = por %p146, %p147
    %p149 = scmp.ne.s32.totalorder %s140, %s141
    %p150 = scmp.eq.s32.totalorder %s25, 0
    %p151 = por %p149, %p150
    %p152 = scmp.ne.s32.totalorder %s140, %s141
    %p153 = scmp.eq.s32.totalorder %s26, 1
    %p154 = por %p152, %p153
    %p156 = scmp.ne.s32.totalorder %s141, %s155
    %p157 = scmp.eq.s32.totalorder %s26, 0
    %p158 = por %p156, %p157
    %s160 = sadd.s32 %s159, 1
    %p163 = scmp.eq.s32.totalorder %s20, 1
    %p164 = scmp.ne.s32.totalorder %s159, %s161
    %p165 = scmp.eq.s32.totalorder %s20, 0
    %p166 = por %p164, %p165
    %p167 = scmp.ne.s32.totalorder %s159, %s161
    %p168 = scmp.eq.s32.totalorder %s25, 1
    %p169 = por %p167, %p168
    %p170 = scmp.ne.s32.totalorder %s161, %s162
    %p171 = scmp.eq.s32.totalorder %s25, 0
    %p172 = por %p170, %p171
    %p173 = scmp.ne.s32.totalorder %s161, %s162
    %p174 = scmp.eq.s32.totalorder %s26, 1
    %p175 = por %p173, %p174
    %p177 = scmp.ne.s32.totalorder %s162, %s176
    %p178 = scmp.eq.s32.totalorder %s26, 0
    %p179 = por %p177, %p178
    %s180 = ssub.s32 %s20, %s27
    %p181 = scmp.eq.s32.totalorder %s180, 0
    %s183 = sadd.s32 %s182, 1
    %s184 = scalar_select %p181, %s182, %s183
    %p187 = pneg %p181
    %p188 = scmp.eq.s32.totalorder %s20, 1
    %p189 = por %p187, %p188
    %p190 = scmp.ne.s32.totalorder %s182, %s185
    %p191 = scmp.eq.s32.totalorder %s20, 0
    %p192 = por %p190, %p191
    %p193 = scmp.ne.s32.totalorder %s182, %s185
    %p194 = scmp.eq.s32.totalorder %s25, 1
    %p195 = por %p193, %p194
    %p196 = scmp.ne.s32.totalorder %s185, %s186
    %p197 = scmp.eq.s32.totalorder %s25, 0
    %p198 = por %p196, %p197
    %p199 = scmp.ne.s32.totalorder %s185, %s186
    %p200 = scmp.eq.s32.totalorder %s26, 1
    %p201 = por %p199, %p200
    %p203 = scmp.ne.s32.totalorder %s186, %s202
    %p204 = scmp.eq.s32.totalorder %s26, 0
    %p205 = por %p203, %p204
    %p206 = scmp.le.s32.totalorder 1, %s20
    %p207 = scmp.lt.s32.totalorder %s20, 3
    %p208 = pnand %p206, %p207
    %p209 = pneg %p208
    // Predicated region
    $region9: #{net_forward.1} parent=5 // pred_check
      _
    $region10: #{net_forward.1} parent=5 // pred_check_branch
      %211 = sbr.rel (%p208) target = $region12
    $region11: #{net_forward.1} parent=5 // pred_region
      %s212 = ssub.s32 %s20, 1
      // Predicated region
      $region13: #{net_forward.1} parent=11 // pred_check
        %p213 = pneg %p67
      $region14: #{net_forward.1} parent=11 // pred_check_branch
        %215 = sbr.rel (%p213) target = $region16
      $region15: #{net_forward.1} parent=11 // pred_region
        _
      $region16: #{net_forward.1} parent=11 // pred_fallthru
        _
      // Predicated region
      $region17: #{net_forward.1} parent=11 // pred_check
        %p216 = pneg %p88
      $region18: #{net_forward.1} parent=11 // pred_check_branch
        %218 = sbr.rel (%p216) target = $region20
      $region19: #{net_forward.1} parent=11 // pred_region
        _
      $region20: #{net_forward.1} parent=11 // pred_fallthru
        _
      // Predicated region
      $region21: #{net_forward.1} parent=11 // pred_check
        %p219 = pneg %p109
      $region22: #{net_forward.1} parent=11 // pred_check_branch
        %221 = sbr.rel (%p219) target = $region24
      $region23: #{net_forward.1} parent=11 // pred_region
        _
      $region24: #{net_forward.1} parent=11 // pred_fallthru
        _
      // Predicated region
      $region25: #{net_forward.1} parent=11 // pred_check
        %p222 = pneg %p130
      $region26: #{net_forward.1} parent=11 // pred_check_branch
        %224 = sbr.rel (%p222) target = $region28
      $region27: #{net_forward.1} parent=11 // pred_region
        _
      $region28: #{net_forward.1} parent=11 // pred_fallthru
        _
      // Predicated region
      $region29: #{net_forward.1} parent=11 // pred_check
        %p225 = pneg %p151
      $region30: #{net_forward.1} parent=11 // pred_check_branch
        %227 = sbr.rel (%p225) target = $region32
      $region31: #{net_forward.1} parent=11 // pred_region
        _
      $region32: #{net_forward.1} parent=11 // pred_fallthru
        _
      // Predicated region
      $region33: #{net_forward.1} parent=11 // pred_check
        %p228 = pneg %p172
      $region34: #{net_forward.1} parent=11 // pred_check_branch
        %230 = sbr.rel (%p228) target = $region36
      $region35: #{net_forward.1} parent=11 // pred_region
        _
      $region36: #{net_forward.1} parent=11 // pred_fallthru
        _
    $region12: #{net_forward.1} parent=5 // pred_fallthru
      _
    %p231 = scmp.lt.s32.totalorder %s20, 2
    // Predicated region
    $region37: #{net_forward.1} parent=5 // pred_check
      %p232 = pneg %p231
    $region38: #{net_forward.1} parent=5 // pred_check_branch
      %234 = sbr.rel (%p232) target = $region40
    $region39: #{net_forward.1} parent=5 // pred_region
      // Predicated region
      $region41: #{net_forward.1} parent=39 // pred_check
        %p235 = pneg %p40
      $region42: #{net_forward.1} parent=39 // pred_check_branch
        %237 = sbr.rel (%p235) target = $region44
      $region43: #{net_forward.1} parent=39 // pred_region
        %s238 = smul.u32 16, %s20
        %p239 = scmp.lt.s32.totalorder %s238, 31
        %s240 = scalar_select %p239, %s238, 31
        %s241 = smul.addr %s240, 4
        %s242 = scalar_lea.vmem %s1, %s241
        %s243 = smul.u32 16, %s20
      $region44: #{net_forward.1} parent=39 // pred_fallthru
        _
    $region40: #{net_forward.1} parent=5 // pred_fallthru
      _
    %p244 = scmp.le.s32.totalorder 1, %s20
    %p245 = scmp.lt.s32.totalorder %s20, 3
    %p246 = pnand %p244, %p245
    %p247 = pneg %p246
    // Predicated region
    $region45: #{net_forward.1} parent=5 // pred_check
      _
    $region46: #{net_forward.1} parent=5 // pred_check_branch
      %249 = sbr.rel (%p246) target = $region48
    $region47: #{net_forward.1} parent=5 // pred_region
      %s250 = ssub.s32 %s20, 1
      %s251 = smul.u32 16, %s25
      %p252 = scmp.lt.s32.totalorder %s251, 31
      %s253 = scalar_select %p252, %s251, 31
      %s254 = smul.addr %s253, 4
      %s255 = scalar_lea.vmem %s1, %s254
      %p256 = pneg %p46
      %p257 = pneg %p43
      %p258 = pneg %p67
      %p259 = pneg %p64
      %p260 = pneg %p88
      %p261 = pneg %p85
      %p262 = pneg %p109
      %p263 = pneg %p106
      %p264 = pneg %p130
      %p265 = pneg %p127
      %p266 = pneg %p151
      %p267 = pneg %p148
      %p268 = pneg %p172
      %p269 = pneg %p169
      %p270 = pneg %p198
      %p271 = pneg %p195
      %s272 = smul.u32 16, %s25
      %p273 = scmp.lt.s32.totalorder %s272, 31
      %s274 = scalar_select %p273, %s272, 31
      %s275 = smul.addr %s274, 8
      %s276 = scalar_lea.vmem %s8, %s275
      %s277 = smul.u32 16, %s25
      %p278 = scmp.lt.s32.totalorder %s277, 31
      %s279 = scalar_select %p278, %s277, 31
      %s280 = smul.addr %s279, 4
      %s281 = scalar_lea.vmem %s1, %s280
      %s282 = smul.u32 16, %s25
      %s283 = smul.u32 16, %s25
      %p284 = scmp.lt.s32.totalorder %s283, 31
      %s285 = scalar_select %p284, %s283, 31
      %s286 = smul.addr %s285, 8
      %s287 = scalar_lea.vmem %s8, %s286
      %s288 = smul.u32 16, %s25
      %v290 = vld [vmem:[%s281] sm:$0xf]
      %v291 = vld [vmem:[%s281 + $0x4] sm:$0xf]
      %v292 = vld [vmem:[%s281 + $0x8] sm:$0xf]
      %v293 = vld [vmem:[%s281 + $0xc] sm:$0xf]
      %v294 = vld [vmem:[%s281 + $0x10] sm:$0xf]
      %v295 = vld [vmem:[%s281 + $0x14] sm:$0xf]
      %v296 = vld [vmem:[%s281 + $0x18] sm:$0xf]
      %v297 = vld [vmem:[%s281 + $0x1c] sm:$0xf]
      %v298 = vld [vmem:[%s281 + $0x20] sm:$0xf]
      %v299 = vld [vmem:[%s281 + $0x24] sm:$0xf]
      %v300 = vld [vmem:[%s281 + $0x28] sm:$0xf]
      %v301 = vld [vmem:[%s281 + $0x2c] sm:$0xf]
      %v302 = vld [vmem:[%s281 + $0x30] sm:$0xf]
      %v303 = vld [vmem:[%s281 + $0x34] sm:$0xf]
      %v304 = vld [vmem:[%s281 + $0x38] sm:$0xf]
      %v305 = vld [vmem:[%s281 + $0x3c] sm:$0xf]
      %v306 = vld [vmem:[%s2] sm:$0xf]
      %v307 = vld [vmem:[%s2 + $0x4] sm:$0xf]
      %v308 = vld [vmem:[%s2 + $0x8] sm:$0xf]
      %v309 = vld [vmem:[%s2 + $0xc] sm:$0xf]
      %v310 = vld [vmem:[%s2 + $0x10] sm:$0xf]
      %v311 = vld [vmem:[%s2 + $0x14] sm:$0xf]
      %v312 = vld [vmem:[%s2 + $0x18] sm:$0xf]
      %v313 = vld [vmem:[%s2 + $0x1c] sm:$0xf]
      %v314 = vld [vmem:[%s2 + $0x20] sm:$0xf]
      %v315 = vld [vmem:[%s2 + $0x24] sm:$0xf]
      %v316 = vld [vmem:[%s2 + $0x28] sm:$0xf]
      %v317 = vld [vmem:[%s2 + $0x2c] sm:$0xf]
      %v318 = vld [vmem:[%s2 + $0x30] sm:$0xf]
      %v319 = vld [vmem:[%s2 + $0x34] sm:$0xf]
      %v320 = vld [vmem:[%s2 + $0x38] sm:$0xf]
      %v321 = vld [vmem:[%s2 + $0x3c] sm:$0xf]
      %v322 = vld [vmem:[%s3] sm:$0x1]
      %v324 = vlaneseq
      %v325 = vshrl.u32 %v324, 7
      %v326 = vsub.s32 0, %v325
      %v327 = vrot.slane %v322, %v326
      %v345 = vunpack.c.l.b16 %v290
      %v346 = vunpack.c.l.b16 %v291
      %v347 = vunpack.c.l.b16 %v292
      %v348 = vunpack.c.l.b16 %v293
      %v349 = vunpack.c.l.b16 %v294
      %v350 = vunpack.c.l.b16 %v295
      %v351 = vunpack.c.l.b16 %v296
      %v352 = vunpack.c.l.b16 %v297
      %v353 = vunpack.c.l.b16 %v298
      %v354 = vunpack.c.l.b16 %v299
      %v355 = vunpack.c.l.b16 %v300
      %v356 = vunpack.c.l.b16 %v301
      %v357 = vunpack.c.l.b16 %v302
      %v358 = vunpack.c.l.b16 %v303
      %v359 = vunpack.c.l.b16 %v304
      %v360 = vunpack.c.l.b16 %v305
      %v361 = vpack.c.b16 %v346, %v345
      %v362 = vpack.c.b16 %v348, %v347
      %v363 = vpack.c.b16 %v350, %v349
      %v364 = vpack.c.b16 %v352, %v351
      %v365 = vpack.c.b16 %v354, %v353
      %v366 = vpack.c.b16 %v356, %v355
      %v367 = vpack.c.b16 %v358, %v357
      %v368 = vpack.c.b16 %v360, %v359
      %v393 = vunpack.c.l.b16 %v306
      %v394 = vunpack.c.l.b16 %v307
      %v395 = vunpack.c.l.b16 %v308
      %v396 = vunpack.c.l.b16 %v309
      %v397 = vunpack.c.l.b16 %v310
      %v398 = vunpack.c.l.b16 %v311
      %v399 = vunpack.c.l.b16 %v312
      %v400 = vunpack.c.l.b16 %v313
      %v401 = vunpack.c.l.b16 %v314
      %v402 = vunpack.c.l.b16 %v315
      %v403 = vunpack.c.l.b16 %v316
      %v404 = vunpack.c.l.b16 %v317
      %v405 = vunpack.c.l.b16 %v318
      %v406 = vunpack.c.l.b16 %v319
      %v407 = vunpack.c.l.b16 %v320
      %v408 = vunpack.c.l.b16 %v321
      %v409 = vpack.c.b16 %v394, %v393
      %v410 = vpack.c.b16 %v396, %v395
      %v411 = vpack.c.b16 %v398, %v397
      %v412 = vpack.c.b16 %v400, %v399
      %v413 = vpack.c.b16 %v402, %v401
      %v414 = vpack.c.b16 %v404, %v403
      %v415 = vpack.c.b16 %v406, %v405
      %v416 = vpack.c.b16 %v408, %v407
      %425 = vmatprep.subr.bf16.mxu0 0
      %426 = vmatpush1.bf16.msra.mxu0 %v409
      %427 = vmatprep.subr.bf16.mxu0 0
      %428 = vmatpush1.bf16.msra.mxu0 %v410
      %429 = vmatprep.subr.bf16.mxu0 0
      %430 = vmatpush1.bf16.msra.mxu0 %v411
      %431 = vmatprep.subr.bf16.mxu0 0
      %432 = vmatpush1.bf16.msra.mxu0 %v412
      %433 = vmatprep.subr.bf16.mxu0 0
      %434 = vmatpush1.bf16.msra.mxu0 %v413
      %435 = vmatprep.subr.bf16.mxu0 0
      %436 = vmatpush1.bf16.msra.mxu0 %v414
      %437 = vmatprep.subr.bf16.mxu0 0
      %438 = vmatpush1.bf16.msra.mxu0 %v415
      %439 = vmatprep.subr.bf16.mxu0 0
      %440 = vmatpush1.bf16.msra.mxu0 %v416
      %441 = vmatprep.subr.bf16.mxu0 0
      %442 = vmatpush1.bf16.msra.mxu0 0
      %443 = vmatprep.subr.bf16.mxu0 0
      %444 = vmatpush1.bf16.msra.mxu0 0
      %445 = vmatprep.subr.bf16.mxu0 0
      %446 = vmatpush1.bf16.msra.mxu0 0
      %447 = vmatprep.subr.bf16.mxu0 0
      %448 = vmatpush1.bf16.msra.mxu0 0
      %449 = vmatprep.subr.bf16.mxu0 0
      %450 = vmatpush1.bf16.msra.mxu0 0
      %451 = vmatprep.subr.bf16.mxu0 0
      %452 = vmatpush1.bf16.msra.mxu0 0
      %453 = vmatprep.subr.bf16.mxu0 0
      %454 = vmatpush1.bf16.msra.mxu0 0
      %455 = vmatprep.subr.bf16.mxu0 0
      %456 = vmatpush1.bf16.msra.mxu0 0
      %457 = vmatprep.mubr.bf16.mxu0 0
      %458 = vmatmul.mubr.bf16.gmra.mrb[0].mxu0 %v361
      %v459 = vpop.f32.mrb[0].mxu0
      %v460 = vadd.f32 %v327, %v459
      %v461 = vpop.f32.mrb[0].mxu0
      %v462 = vpop.f32.mrb[0].mxu0
      %v463 = vadd.f32 %v327, %v462
      %v464 = vpop.f32.mrb[0].mxu0
      %465 = vmatprep.mubr.bf16.mxu0 0
      %466 = vmatmul.mubr.bf16.gmra.mrb[0].mxu0 %v362
      %v467 = vpop.f32.mrb[0].mxu0
      %v468 = vadd.f32 %v327, %v467
      %v469 = vpop.f32.mrb[0].mxu0
      %v470 = vpop.f32.mrb[0].mxu0
      %v471 = vadd.f32 %v327, %v470
      %v472 = vpop.f32.mrb[0].mxu0
      %473 = vmatprep.mubr.bf16.mxu0 0
      %474 = vmatmul.mubr.bf16.gmra.mrb[0].mxu0 %v363
      %v475 = vpop.f32.mrb[0].mxu0
      %v476 = vadd.f32 %v327, %v475
      %v477 = vpop.f32.mrb[0].mxu0
      %v478 = vpop.f32.mrb[0].mxu0
      %v479 = vadd.f32 %v327, %v478
      %v480 = vpop.f32.mrb[0].mxu0
      %481 = vmatprep.mubr.bf16.mxu0 0
      %482 = vmatmul.mubr.bf16.gmra.mrb[0].mxu0 %v364
      %v483 = vpop.f32.mrb[0].mxu0
      %v484 = vadd.f32 %v327, %v483
      %v485 = vpop.f32.mrb[0].mxu0
      %v486 = vpop.f32.mrb[0].mxu0
      %v487 = vadd.f32 %v327, %v486
      %v488 = vpop.f32.mrb[0].mxu0
      %489 = vmatprep.mubr.bf16.mxu0 0
      %490 = vmatmul.mubr.bf16.gmra.mrb[0].mxu0 %v365
      %v491 = vpop.f32.mrb[0].mxu0
      %v492 = vadd.f32 %v327, %v491
      %v493 = vpop.f32.mrb[0].mxu0
      %v494 = vpop.f32.mrb[0].mxu0
      %v495 = vadd.f32 %v327, %v494
      %v496 = vpop.f32.mrb[0].mxu0
      %497 = vmatprep.mubr.bf16.mxu0 0
      %498 = vmatmul.mubr.bf16.gmra.mrb[0].mxu0 %v366
      %v499 = vpop.f32.mrb[0].mxu0
      %v500 = vadd.f32 %v327, %v499
      %v501 = vpop.f32.mrb[0].mxu0
      %v502 = vpop.f32.mrb[0].mxu0
      %v503 = vadd.f32 %v327, %v502
      %v504 = vpop.f32.mrb[0].mxu0
      %505 = vmatprep.mubr.bf16.mxu0 0
      %506 = vmatmul.mubr.bf16.gmra.mrb[0].mxu0 %v367
      %v507 = vpop.f32.mrb[0].mxu0
      %v508 = vadd.f32 %v327, %v507
      %v509 = vpop.f32.mrb[0].mxu0
      %v510 = vpop.f32.mrb[0].mxu0
      %v511 = vadd.f32 %v327, %v510
      %v512 = vpop.f32.mrb[0].mxu0
      %513 = vmatprep.mubr.bf16.mxu0 0
      %514 = vmatmul.mubr.bf16.gmra.mrb[0].mxu0 %v368
      %v515 = vpop.f32.mrb[0].mxu0
      %v516 = vadd.f32 %v327, %v515
      %v517 = vpop.f32.mrb[0].mxu0
      %v518 = vpop.f32.mrb[0].mxu0
      %v519 = vadd.f32 %v327, %v518
      %v520 = vpop.f32.mrb[0].mxu0
      %521 = vdwg.mxu0
      %v522 = vmax.f32 %v460, 0.0
      %v523 = vmax.f32 %v463, 0.0
      %v524 = vmax.f32 %v468, 0.0
      %v525 = vmax.f32 %v471, 0.0
      %v526 = vmax.f32 %v476, 0.0
      %v527 = vmax.f32 %v479, 0.0
      %v528 = vmax.f32 %v484, 0.0
      %v529 = vmax.f32 %v487, 0.0
      %v530 = vmax.f32 %v492, 0.0
      %v531 = vmax.f32 %v495, 0.0
      %v532 = vmax.f32 %v500, 0.0
      %v533 = vmax.f32 %v503, 0.0
      %v534 = vmax.f32 %v508, 0.0
      %v535 = vmax.f32 %v511, 0.0
      %v536 = vmax.f32 %v516, 0.0
      %v537 = vmax.f32 %v519, 0.0
      %v538 = vpack.c.bf16 %v523, %v522
      %v539 = vpack.c.bf16 %v525, %v524
      %v540 = vpack.c.bf16 %v527, %v526
      %v541 = vpack.c.bf16 %v529, %v528
      %v542 = vpack.c.bf16 %v531, %v530
      %v543 = vpack.c.bf16 %v533, %v532
      %v544 = vpack.c.bf16 %v535, %v534
      %v545 = vpack.c.bf16 %v537, %v536
      %v546 = vld [vmem:[%s4] sm:$0xf]
      %v547 = vld [vmem:[%s4 + $0x4] sm:$0xf]
      %v548 = vld [vmem:[%s4 + $0x8] sm:$0xf]
      %v549 = vld [vmem:[%s4 + $0xc] sm:$0xf]
      %v550 = vld [vmem:[%s4 + $0x10] sm:$0xf]
      %v551 = vld [vmem:[%s4 + $0x14] sm:$0xf]
      %v552 = vld [vmem:[%s4 + $0x18] sm:$0xf]
      %v553 = vld [vmem:[%s4 + $0x1c] sm:$0xf]
      %v554 = vld [vmem:[%s4 + $0x20] sm:$0xf]
      %v555 = vld [vmem:[%s4 + $0x24] sm:$0xf]
      %v556 = vld [vmem:[%s4 + $0x28] sm:$0xf]
      %v557 = vld [vmem:[%s4 + $0x2c] sm:$0xf]
      %v558 = vld [vmem:[%s4 + $0x30] sm:$0xf]
      %v559 = vld [vmem:[%s4 + $0x34] sm:$0xf]
      %v560 = vld [vmem:[%s4 + $0x38] sm:$0xf]
      %v561 = vld [vmem:[%s4 + $0x3c] sm:$0xf]
      %v562 = vld [vmem:[%s5] sm:$0x1]
      %v564 = vlaneseq
      %v565 = vshrl.u32 %v564, 7
      %v566 = vsub.s32 0, %v565
      %v567 = vrot.slane %v562, %v566
      %v585 = vunpack.c.l.b16 %v546
      %v586 = vunpack.c.l.b16 %v547
      %v587 = vunpack.c.l.b16 %v548
      %v588 = vunpack.c.l.b16 %v549
      %v589 = vunpack.c.l.b16 %v550
      %v590 = vunpack.c.l.b16 %v551
      %v591 = vunpack.c.l.b16 %v552
      %v592 = vunpack.c.l.b16 %v553
      %v593 = vunpack.c.l.b16 %v554
      %v594 = vunpack.c.l.b16 %v555
      %v595 = vunpack.c.l.b16 %v556
      %v596 = vunpack.c.l.b16 %v557
      %v597 = vunpack.c.l.b16 %v558
      %v598 = vunpack.c.l.b16 %v559
      %v599 = vunpack.c.l.b16 %v560
      %v600 = vunpack.c.l.b16 %v561
      %v601 = vpack.c.b16 %v586, %v585
      %v602 = vpack.c.b16 %v588, %v587
      %v603 = vpack.c.b16 %v590, %v589
      %v604 = vpack.c.b16 %v592, %v591
      %v605 = vpack.c.b16 %v594, %v593
      %v606 = vpack.c.b16 %v596, %v595
      %v607 = vpack.c.b16 %v598, %v597
      %v608 = vpack.c.b16 %v600, %v599
      %617 = vmatprep.subr.bf16.mxu0 0
      %618 = vmatpush1.bf16.msra.mxu0 %v601
      %619 = vmatprep.subr.bf16.mxu0 0
      %620 = vmatpush1.bf16.msra.mxu0 %v602
      %621 = vmatprep.subr.bf16.mxu0 0
      %622 = vmatpush1.bf16.msra.mxu0 %v603
      %623 = vmatprep.subr.bf16.mxu0 0
      %624 = vmatpush1.bf16.msra.mxu0 %v604
      %625 = vmatprep.subr.bf16.mxu0 0
      %626 = vmatpush1.bf16.msra.mxu0 %v605
      %627 = vmatprep.subr.bf16.mxu0 0
      %628 = vmatpush1.bf16.msra.mxu0 %v606
      %629 = vmatprep.subr.bf16.mxu0 0
      %630 = vmatpush1.bf16.msra.mxu0 %v607
      %631 = vmatprep.subr.bf16.mxu0 0
      %632 = vmatpush1.bf16.msra.mxu0 %v608
      %633 = vmatprep.subr.bf16.mxu0 0
      %634 = vmatpush1.bf16.msra.mxu0 0
      %635 = vmatprep.subr.bf16.mxu0 0
      %636 = vmatpush1.bf16.msra.mxu0 0
      %637 = vmatprep.subr.bf16.mxu0 0
      %638 = vmatpush1.bf16.msra.mxu0 0
      %639 = vmatprep.subr.bf16.mxu0 0
      %640 = vmatpush1.bf16.msra.mxu0 0
      %641 = vmatprep.subr.bf16.mxu0 0
      %642 = vmatpush1.bf16.msra.mxu0 0
      %643 = vmatprep.subr.bf16.mxu0 0
      %644 = vmatpush1.bf16.msra.mxu0 0
      %645 = vmatprep.subr.bf16.mxu0 0
      %646 = vmatpush1.bf16.msra.mxu0 0
      %647 = vmatprep.subr.bf16.mxu0 0
      %648 = vmatpush1.bf16.msra.mxu0 0
      %649 = vmatprep.mubr.bf16.mxu0 0
      %650 = vmatmul.mubr.bf16.gmra.mrb[0].mxu0 %v538
      %v651 = vpop.f32.mrb[0].mxu0
      %v652 = vadd.f32 %v567, %v651
      %v653 = vpop.f32.mrb[0].mxu0
      %v654 = vpop.f32.mrb[0].mxu0
      %v655 = vadd.f32 %v567, %v654
      %v656 = vpop.f32.mrb[0].mxu0
      %657 = vmatprep.mubr.bf16.mxu0 0
      %658 = vmatmul.mubr.bf16.gmra.mrb[0].mxu0 %v539
      %v659 = vpop.f32.mrb[0].mxu0
      %v660 = vadd.f32 %v567, %v659
      %v661 = vpop.f32.mrb[0].mxu0
      %v662 = vpop.f32.mrb[0].mxu0
      %v663 = vadd.f32 %v567, %v662
      %v664 = vpop.f32.mrb[0].mxu0
      %665 = vmatprep.mubr.bf16.mxu0 0
      %666 = vmatmul.mubr.bf16.gmra.mrb[0].mxu0 %v540
      %v667 = vpop.f32.mrb[0].mxu0
      %v668 = vadd.f32 %v567, %v667
      %v669 = vpop.f32.mrb[0].mxu0
      %v670 = vpop.f32.mrb[0].mxu0
      %v671 = vadd.f32 %v567, %v670
      %v672 = vpop.f32.mrb[0].mxu0
      %673 = vmatprep.mubr.bf16.mxu0 0
      %674 = vmatmul.mubr.bf16.gmra.mrb[0].mxu0 %v541
      %v675 = vpop.f32.mrb[0].mxu0
      %v676 = vadd.f32 %v567, %v675
      %v677 = vpop.f32.mrb[0].mxu0
      %v678 = vpop.f32.mrb[0].mxu0
      %v679 = vadd.f32 %v567, %v678
      %v680 = vpop.f32.mrb[0].mxu0
      %681 = vmatprep.mubr.bf16.mxu0 0
      %682 = vmatmul.mubr.bf16.gmra.mrb[0].mxu0 %v542
      %v683 = vpop.f32.mrb[0].mxu0
      %v684 = vadd.f32 %v567, %v683
      %v685 = vpop.f32.mrb[0].mxu0
      %v686 = vpop.f32.mrb[0].mxu0
      %v687 = vadd.f32 %v567, %v686
      %v688 = vpop.f32.mrb[0].mxu0
      %689 = vmatprep.mubr.bf16.mxu0 0
      %690 = vmatmul.mubr.bf16.gmra.mrb[0].mxu0 %v543
      %v691 = vpop.f32.mrb[0].mxu0
      %v692 = vadd.f32 %v567, %v691
      %v693 = vpop.f32.mrb[0].mxu0
      %v694 = vpop.f32.mrb[0].mxu0
      %v695 = vadd.f32 %v567, %v694
      %v696 = vpop.f32.mrb[0].mxu0
      %697 = vmatprep.mubr.bf16.mxu0 0
      %698 = vmatmul.mubr.bf16.gmra.mrb[0].mxu0 %v544
      %v699 = vpop.f32.mrb[0].mxu0
      %v700 = vadd.f32 %v567, %v699
      %v701 = vpop.f32.mrb[0].mxu0
      %v702 = vpop.f32.mrb[0].mxu0
      %v703 = vadd.f32 %v567, %v702
      %v704 = vpop.f32.mrb[0].mxu0
      %705 = vmatprep.mubr.bf16.mxu0 0
      %706 = vmatmul.mubr.bf16.gmra.mrb[0].mxu0 %v545
      %v707 = vpop.f32.mrb[0].mxu0
      %v708 = vadd.f32 %v567, %v707
      %v709 = vpop.f32.mrb[0].mxu0
      %v710 = vpop.f32.mrb[0].mxu0
      %v711 = vadd.f32 %v567, %v710
      %v712 = vpop.f32.mrb[0].mxu0
      %713 = vdwg.mxu0
      %v714 = vmax.f32 %v652, 0.0
      %v715 = vmax.f32 %v655, 0.0
      %v716 = vmax.f32 %v660, 0.0
      %v717 = vmax.f32 %v663, 0.0
      %v718 = vmax.f32 %v668, 0.0
      %v719 = vmax.f32 %v671, 0.0
      %v720 = vmax.f32 %v676, 0.0
      %v721 = vmax.f32 %v679, 0.0
      %v722 = vmax.f32 %v684, 0.0
      %v723 = vmax.f32 %v687, 0.0
      %v724 = vmax.f32 %v692, 0.0
      %v725 = vmax.f32 %v695, 0.0
      %v726 = vmax.f32 %v700, 0.0
      %v727 = vmax.f32 %v703, 0.0
      %v728 = vmax.f32 %v708, 0.0
      %v729 = vmax.f32 %v711, 0.0
      %v730 = vpack.c.bf16 %v715, %v714
      %v731 = vpack.c.bf16 %v717, %v716
      %v732 = vpack.c.bf16 %v719, %v718
      %v733 = vpack.c.bf16 %v721, %v720
      %v734 = vpack.c.bf16 %v723, %v722
      %v735 = vpack.c.bf16 %v725, %v724
      %v736 = vpack.c.bf16 %v727, %v726
      %v737 = vpack.c.bf16 %v729, %v728
      %v738 = vld [vmem:[%s6] sm:$0xf]
      %v739 = vld [vmem:[%s6 + $0x4] sm:$0xf]
      %v740 = vld [vmem:[%s6 + $0x8] sm:$0xf]
      %v741 = vld [vmem:[%s6 + $0xc] sm:$0xf]
      %v742 = vld [vmem:[%s6 + $0x10] sm:$0xf]
      %v743 = vld [vmem:[%s6 + $0x14] sm:$0xf]
      %v744 = vld [vmem:[%s6 + $0x18] sm:$0xf]
      %v745 = vld [vmem:[%s6 + $0x1c] sm:$0xf]
      %v746 = vld [vmem:[%s6 + $0x20] sm:$0xf]
      %v747 = vld [vmem:[%s6 + $0x24] sm:$0xf]
      %v748 = vld [vmem:[%s6 + $0x28] sm:$0xf]
      %v749 = vld [vmem:[%s6 + $0x2c] sm:$0xf]
      %v750 = vld [vmem:[%s6 + $0x30] sm:$0xf]
      %v751 = vld [vmem:[%s6 + $0x34] sm:$0xf]
      %v752 = vld [vmem:[%s6 + $0x38] sm:$0xf]
      %v753 = vld [vmem:[%s6 + $0x3c] sm:$0xf]
      %v754 = vld [vmem:[%s7] sm:$0x1]
      %v756 = vlaneseq
      %v757 = vshrl.u32 %v756, 7
      %v758 = vsub.s32 0, %v757
      %v759 = vrot.slane %v754, %v758
      %v777 = vunpack.c.l.b16 %v738
      %v778 = vunpack.c.l.b16 %v739
      %v779 = vunpack.c.l.b16 %v740
      %v780 = vunpack.c.l.b16 %v741
      %v781 = vunpack.c.l.b16 %v742
      %v782 = vunpack.c.l.b16 %v743
      %v783 = vunpack.c.l.b16 %v744
      %v784 = vunpack.c.l.b16 %v745
      %v785 = vunpack.c.l.b16 %v746
      %v786 = vunpack.c.l.b16 %v747
      %v787 = vunpack.c.l.b16 %v748
      %v788 = vunpack.c.l.b16 %v749
      %v789 = vunpack.c.l.b16 %v750
      %v790 = vunpack.c.l.b16 %v751
      %v791 = vunpack.c.l.b16 %v752
      %v792 = vunpack.c.l.b16 %v753
      %v793 = vpack.c.b16 %v778, %v777
      %v794 = vpack.c.b16 %v780, %v779
      %v795 = vpack.c.b16 %v782, %v781
      %v796 = vpack.c.b16 %v784, %v783
      %v797 = vpack.c.b16 %v786, %v785
      %v798 = vpack.c.b16 %v788, %v787
      %v799 = vpack.c.b16 %v790, %v789
      %v800 = vpack.c.b16 %v792, %v791
      %809 = vmatprep.subr.bf16.mxu0 0
      %810 = vmatpush1.bf16.msra.mxu0 %v793
      %811 = vmatprep.subr.bf16.mxu0 0
      %812 = vmatpush1.bf16.msra.mxu0 %v794
      %813 = vmatprep.subr.bf16.mxu0 0
      %814 = vmatpush1.bf16.msra.mxu0 %v795
      %815 = vmatprep.subr.bf16.mxu0 0
      %816 = vmatpush1.bf16.msra.mxu0 %v796
      %817 = vmatprep.subr.bf16.mxu0 0
      %818 = vmatpush1.bf16.msra.mxu0 %v797
      %819 = vmatprep.subr.bf16.mxu0 0
      %820 = vmatpush1.bf16.msra.mxu0 %v798
      %821 = vmatprep.subr.bf16.mxu0 0
      %822 = vmatpush1.bf16.msra.mxu0 %v799
      %823 = vmatprep.subr.bf16.mxu0 0
      %824 = vmatpush1.bf16.msra.mxu0 %v800
      %825 = vmatprep.subr.bf16.mxu0 0
      %826 = vmatpush1.bf16.msra.mxu0 0
      %827 = vmatprep.subr.bf16.mxu0 0
      %828 = vmatpush1.bf16.msra.mxu0 0
      %829 = vmatprep.subr.bf16.mxu0 0
      %830 = vmatpush1.bf16.msra.mxu0 0
      %831 = vmatprep.subr.bf16.mxu0 0
      %832 = vmatpush1.bf16.msra.mxu0 0
      %833 = vmatprep.subr.bf16.mxu0 0
      %834 = vmatpush1.bf16.msra.mxu0 0
      %835 = vmatprep.subr.bf16.mxu0 0
      %836 = vmatpush1.bf16.msra.mxu0 0
      %837 = vmatprep.subr.bf16.mxu0 0
      %838 = vmatpush1.bf16.msra.mxu0 0
      %839 = vmatprep.subr.bf16.mxu0 0
      %840 = vmatpush1.bf16.msra.mxu0 0
      %841 = vmatprep.mubr.bf16.mxu0 0
      %842 = vmatmul.mubr.bf16.gmra.mrb[0].mxu0 %v730
      %v843 = vpop.f32.mrb[0].mxu0
      %v844 = vadd.f32 %v759, %v843
      %v845 = vpop.f32.mrb[0].mxu0
      %v846 = vpop.f32.mrb[0].mxu0
      %v847 = vadd.f32 %v759, %v846
      %v848 = vpop.f32.mrb[0].mxu0
      %849 = vmatprep.mubr.bf16.mxu0 0
      %850 = vmatmul.mubr.bf16.gmra.mrb[0].mxu0 %v731
      %v851 = vpop.f32.mrb[0].mxu0
      %v852 = vadd.f32 %v759, %v851
      %v853 = vpop.f32.mrb[0].mxu0
      %v854 = vpop.f32.mrb[0].mxu0
      %v855 = vadd.f32 %v759, %v854
      %v856 = vpop.f32.mrb[0].mxu0
      %857 = vmatprep.mubr.bf16.mxu0 0
      %858 = vmatmul.mubr.bf16.gmra.mrb[0].mxu0 %v732
      %v859 = vpop.f32.mrb[0].mxu0
      %v860 = vadd.f32 %v759, %v859
      %v861 = vpop.f32.mrb[0].mxu0
      %v862 = vpop.f32.mrb[0].mxu0
      %v863 = vadd.f32 %v759, %v862
      %v864 = vpop.f32.mrb[0].mxu0
      %865 = vmatprep.mubr.bf16.mxu0 0
      %866 = vmatmul.mubr.bf16.gmra.mrb[0].mxu0 %v733
      %v867 = vpop.f32.mrb[0].mxu0
      %v868 = vadd.f32 %v759, %v867
      %v869 = vpop.f32.mrb[0].mxu0
      %v870 = vpop.f32.mrb[0].mxu0
      %v871 = vadd.f32 %v759, %v870
      %v872 = vpop.f32.mrb[0].mxu0
      %873 = vmatprep.mubr.bf16.mxu0 0
      %874 = vmatmul.mubr.bf16.gmra.mrb[0].mxu0 %v734
      %v875 = vpop.f32.mrb[0].mxu0
      %v876 = vadd.f32 %v759, %v875
      %v877 = vpop.f32.mrb[0].mxu0
      %v878 = vpop.f32.mrb[0].mxu0
      %v879 = vadd.f32 %v759, %v878
      %v880 = vpop.f32.mrb[0].mxu0
      %881 = vmatprep.mubr.bf16.mxu0 0
      %882 = vmatmul.mubr.bf16.gmra.mrb[0].mxu0 %v735
      %v883 = vpop.f32.mrb[0].mxu0
      %v884 = vadd.f32 %v759, %v883
      %v885 = vpop.f32.mrb[0].mxu0
      %v886 = vpop.f32.mrb[0].mxu0
      %v887 = vadd.f32 %v759, %v886
      %v888 = vpop.f32.mrb[0].mxu0
      %889 = vmatprep.mubr.bf16.mxu0 0
      %890 = vmatmul.mubr.bf16.gmra.mrb[0].mxu0 %v736
      %v891 = vpop.f32.mrb[0].mxu0
      %v892 = vadd.f32 %v759, %v891
      %v893 = vpop.f32.mrb[0].mxu0
      %v894 = vpop.f32.mrb[0].mxu0
      %v895 = vadd.f32 %v759, %v894
      %v896 = vpop.f32.mrb[0].mxu0
      %897 = vmatprep.mubr.bf16.mxu0 0
      %898 = vmatmul.mubr.bf16.gmra.mrb[0].mxu0 %v737
      %v899 = vpop.f32.mrb[0].mxu0
      %v900 = vadd.f32 %v759, %v899
      %v901 = vpop.f32.mrb[0].mxu0
      %v902 = vpop.f32.mrb[0].mxu0
      %v903 = vadd.f32 %v759, %v902
      %v904 = vpop.f32.mrb[0].mxu0
      %905 = vdwg.mxu0
      %v906 = vlaneseq
      %v907 = vand.u32 %v906, 127
      %s908 = sld [smem:[#allocation3]]
      %v909 = vstv %s908
      %vm910 = vcmp.lt.s32.totalorder %v907, %v909
      %s911 = sld [smem:[#allocation3 + $0x1]]
      %v912 = vstv %s911
      %vm913 = vcmp.ge.s32.totalorder %v907, %v912
      %vm914 = vmor %vm910, %vm913
      %v915 = vsel %vm914, -1e+11, %v844
      %v916 = vsel %vm914, -1e+11, %v847
      %v917 = vsel %vm914, -1e+11, %v852
      %v918 = vsel %vm914, -1e+11, %v855
      %v919 = vsel %vm914, -1e+11, %v860
      %v920 = vsel %vm914, -1e+11, %v863
      %v921 = vsel %vm914, -1e+11, %v868
      %v922 = vsel %vm914, -1e+11, %v871
      %v923 = vsel %vm914, -1e+11, %v876
      %v924 = vsel %vm914, -1e+11, %v879
      %v925 = vsel %vm914, -1e+11, %v884
      %v926 = vsel %vm914, -1e+11, %v887
      %v927 = vsel %vm914, -1e+11, %v892
      %v928 = vsel %vm914, -1e+11, %v895
      %v929 = vsel %vm914, -1e+11, %v900
      %v930 = vsel %vm914, -1e+11, %v903
      %931 = vst [vmem:[%s287] sm:$0xff] %v915
      %932 = vst [vmem:[%s287 + $0x8] sm:$0xff] %v916
      %933 = vst [vmem:[%s287 + $0x10] sm:$0xff] %v917
      %934 = vst [vmem:[%s287 + $0x18] sm:$0xff] %v918
      %935 = vst [vmem:[%s287 + $0x20] sm:$0xff] %v919
      %936 = vst [vmem:[%s287 + $0x28] sm:$0xff] %v920
      %937 = vst [vmem:[%s287 + $0x30] sm:$0xff] %v921
      %938 = vst [vmem:[%s287 + $0x38] sm:$0xff] %v922
      %939 = vst [vmem:[%s287 + $0x40] sm:$0xff] %v923
      %940 = vst [vmem:[%s287 + $0x48] sm:$0xff] %v924
      %941 = vst [vmem:[%s287 + $0x50] sm:$0xff] %v925
      %942 = vst [vmem:[%s287 + $0x58] sm:$0xff] %v926
      %943 = vst [vmem:[%s287 + $0x60] sm:$0xff] %v927
      %944 = vst [vmem:[%s287 + $0x68] sm:$0xff] %v928
      %945 = vst [vmem:[%s287 + $0x70] sm:$0xff] %v929
      %946 = vst [vmem:[%s287 + $0x78] sm:$0xff] %v930
      %s947 = smul.u32 16, %s25
      %p948 = scmp.lt.s32.totalorder %s947, 31
      %s949 = scalar_select %p948, %s947, 31
      %s950 = smul.addr %s949, 8
      %s951 = scalar_lea.vmem %s8, %s950
      // Predicated region
      $region49: #{net_forward.1} parent=47 // pred_check
        %p952 = pneg %p195
      $region50: #{net_forward.1} parent=47 // pred_check_branch
        %954 = sbr.rel (%p952) target = $region52
      $region51: #{net_forward.1} parent=47 // pred_region
        %s955 = smul.u32 16, %s25
      $region52: #{net_forward.1} parent=47 // pred_fallthru
        _
    $region48: #{net_forward.1} parent=5 // pred_fallthru
      _
    %p956 = scmp.le.s32.totalorder 2, %s20
    // Predicated region
    $region53: #{net_forward.1} parent=5 // pred_check
      %p957 = pneg %p956
    $region54: #{net_forward.1} parent=5 // pred_check_branch
      %959 = sbr.rel (%p957) target = $region56
    $region55: #{net_forward.1} parent=5 // pred_region
      %s960 = ssub.s32 %s20, 2
      // Predicated region
      $region57: #{net_forward.1} parent=55 // pred_check
        %p961 = pneg %p201
      $region58: #{net_forward.1} parent=55 // pred_check_branch
        %963 = sbr.rel (%p961) target = $region60
      $region59: #{net_forward.1} parent=55 // pred_region
        %s964 = smul.u32 16, %s26
        %p965 = scmp.lt.s32.totalorder %s964, 31
        %s966 = scalar_select %p965, %s964, 31
        %s967 = smul.addr %s966, 8
        %s968 = scalar_lea.vmem %s8, %s967
      $region60: #{net_forward.1} parent=55 // pred_fallthru
        _
    $region56: #{net_forward.1} parent=5 // pred_fallthru
      _
  $region6: #{net_forward.1} parent=0 // loop_footer
    %s24 = sadd.s32 1, %s20
  $region7: #{net_forward.1} parent=0 // loop_footer_branch
    %19 = sbr.rel target = $region3
  $region8: #{net_forward.1} parent=0 // loop_exit
    _

</llo_original>
